<compile_context>
chip_gen: v7x
topology: tpu7x:2x2x1
jax: 0.10.0
libtpu: 0.0.40
codegen_flags: <defaults>
</compile_context>

<pallas_src>
import functools

import jax
import jax.numpy as jnp
from jax.experimental import pallas as pl
from jax.experimental.pallas import tpu as pltpu


# ----------------------- pure-JAX helpers (tiny, one-time) -------------------

def rel_to_abs(x):
    """Exact port of the PyTorch rel_to_abs. x: (B, L, M) -> (B, L, (M+1)//2)."""
    b, l, m = x.shape
    r = (m + 1) // 2
    col_pad = jnp.zeros((b, l, 1), x.dtype)
    x = jnp.concatenate([x, col_pad], axis=2)                      # (b, l, m+1)
    flat_x = x.reshape(b, l * (m + 1))
    flat_pad = jnp.zeros((b, m - l), x.dtype)
    flat_x_padded = jnp.concatenate([flat_x, flat_pad], axis=1)    # (b, (l+1)*m)
    final_x = flat_x_padded.reshape(b, l + 1, m)
    return final_x[:, :l, m - r:]                                  # (b, l, r)


def _selection_matrix(l, R):
    """S: (l, R, r) with rel_to_abs(v)[b, i, k] == v[b, i, :] @ S[i, :, k].

    Built by pushing the R basis vectors through the *exact* rel_to_abs, so the
    zero-padding behaviour is reproduced bit-for-bit.  Valid whenever l <= r
    (rel_to_abs never reads across rows in that regime -- the module's intended
    use)."""
    basis = jnp.broadcast_to(jnp.eye(R, dtype=jnp.float32)[:, None, :], (R, l, R))
    s = rel_to_abs(basis)                          # (R, l, r)
    return jnp.transpose(s, (1, 0, 2))             # (l, R, r)


def _fused_tables(rel_height, rel_width, x, y):
    """Pre-fuse q@rel tables, rel_to_abs, expand_dim, rearrange and the final add.

    Returns W of shape (x, y*d, y*kout) such that for q4 = q.reshape(b, x, y, d)

        out[b, px*y + py, i*r + j] = q4[b, px, py, :] @ W[px][py*d:(py+1)*d,
                                                              py*kout + i*r + j]

    reproduces the module's forward exactly (width + height logits combined)."""
    f32 = jnp.float32
    R, d = rel_width.shape
    r = (R + 1) // 2
    kout = r * r
    s_w = _selection_matrix(y, R)                                    # (y, R, r)
    s_h = _selection_matrix(x, R)                                    # (x, R, r)
    wt = jnp.einsum('Rd,yRj->ydj', rel_width.astype(f32), s_w)       # (y, d, r)
    ht = jnp.einsum('Rd,xRa->xda', rel_height.astype(f32), s_h)      # (x, d, r)
    # T[px, py, :, i*r + j] = wt[py, :, j] + ht[px, :, i]
    t = wt[None, :, :, None, :] + ht[:, None, :, :, None]            # (x, y, d, r, r)
    t = t.reshape(x, y, d, kout)                                     # (x, y, d, kout)
    # Block-diagonal over py: W[px, py*d+dd, q*kout+k] = (py == q) * t[px, py, dd, k]
    w = jnp.einsum('pq,xpdk->xpdqk', jnp.eye(y, dtype=f32), t)       # (x, y, d, y, kout)
    return w.reshape(x, y * d, y * kout)


# ------------------------------ Pallas kernel --------------------------------

def _make_kernel(x, y, d, kout, precision):
    yd = y * d
    yk = y * kout

    def kernel(q_ref, w_ref, o_ref):
        # q_ref: (nb, x*y*d)       q rows for this batch tile (native dtype, dense layout)
        # w_ref: (x, y*d, y*kout)  fused block-diagonal tables, VMEM-resident
        # o_ref: (nb, x*y*kout)    final logits, written in 128-aligned lane-dense slices
        for px in range(x):        # static unroll; x <= rel_size (guarded), body = 1 dot + 1 store
            q_px = q_ref[:, px * yd:(px + 1) * yd].astype(jnp.float32)   # (nb, y*d)
            res = jnp.dot(q_px, w_ref[px],
                          preferred_element_type=jnp.float32,
                          precision=precision)                            # (nb, y*kout)
            o_ref[:, px * yk:(px + 1) * yk] = res.astype(o_ref.dtype)

    return kernel


# --------------------------------- wrapper -----------------------------------

def _pick_batch_tile(b, bytes_per_row, resident_bytes, vmem_limit_bytes):
    """Largest sublane-legal batch tile (nb == b or a multiple of 8) under budget."""
    budget = max(1, (vmem_limit_bytes * 3 // 4 - resident_bytes)
                 // max(1, bytes_per_row))
    legal = [c for c in range(8, b + 1, 8) if b % c == 0]
    legal.append(b)                                   # nb == b is always layout-legal
    legal = sorted(set(legal))
    fitting = [c for c in legal if c <= budget] or [legal[0]]
    nb = max(fitting)
    if b // nb < 2:                                   # prefer >=2 grid steps (v7x megacore)
        smaller = [c for c in fitting if b // c >= 2]
        if smaller:
            nb = max(smaller)
    return nb


def rel_pos_emb_forward(q, rel_height, rel_width, block_size, *,
                        precision=jax.lax.Precision.DEFAULT,
                        out_dtype=jnp.float32,
                        batch_tile=None,
                        vmem_limit_bytes=32 * 1024 * 1024):
    """q: (B, N, D) with N = block_size * y. Returns (B, N, r*r) in out_dtype."""
    b, n, d = q.shape
    x = block_size
    assert n % x == 0, "sequence length must be divisible by block_size"
    y = n // x
    R, dk = rel_width.shape
    assert rel_height.shape == (R, dk) and dk == d
    r = (R + 1) // 2
    kout = r * r

    if y > r or x > r:
        # TODO(synk): the fused-table trick only covers the block-extent <= rel_size
        # regime of rel_to_abs (the module's intended use).
        raise NotImplementedError("fused kernel requires block extents <= rel_size")

    w = _fused_tables(rel_height, rel_width, x, y)          # (x, y*d, y*kout) f32
    w_bytes = 4 * x * (y * d) * (y * kout)
    if 2 * w_bytes > vmem_limit_bytes // 2:
        # TODO(synk): stream the per-px table slabs (extra grid axis over px) for very
        # large rel_size / dim_head instead of keeping the whole table VMEM-resident.
        raise NotImplementedError("fused table too large to keep VMEM-resident")

    qf = q.reshape(b, x * y * d)                            # contiguous -> free, no astype

    bytes_per_row = 2 * (q.dtype.itemsize * x * y * d
                         + jnp.dtype(out_dtype).itemsize * x * y * kout)
    if batch_tile is None:
        nb = _pick_batch_tile(b, bytes_per_row, 2 * w_bytes, vmem_limit_bytes)
    else:
        nb = batch_tile
        assert b % nb == 0 and (nb == b or nb % 8 == 0), \
            "batch_tile must be b or a multiple of 8 dividing b"

    grid = (b // nb,)

    out = pl.pallas_call(
        _make_kernel(x, y, d, kout, precision),
        out_shape=jax.ShapeDtypeStruct((b, x * y * kout), out_dtype),
        grid=grid,
        in_specs=[
            pl.BlockSpec((nb, x * y * d), lambda i: (i, 0)),
            pl.BlockSpec((x, y * d, y * kout), lambda i: (0, 0, 0)),   # resident
        ],
        out_specs=pl.BlockSpec((nb, x * y * kout), lambda i: (i, 0)),
        compiler_params=pltpu.CompilerParams(
            dimension_semantics=("parallel",),
            vmem_limit_bytes=vmem_limit_bytes),
    )(qf, w)

    return out.reshape(b, n, kout)                          # contiguous -> free


# ---------------------------- pure-JAX reference -----------------------------

def _reference_forward(q, rel_height, rel_width, block_size):
    b, n, d = q.shape
    x = block_size
    y = n // x
    R = rel_width.shape[0]
    r = (R + 1) // 2
    q4 = q.reshape(b, x, y, d)

    def relative_logits_1d(qq, rel_k):
        bb, h, w, _ = qq.shape
        rr = (rel_k.shape[0] + 1) // 2
        logits = jnp.einsum('bxyd,rd->bxyr', qq, rel_k,
                            precision=jax.lax.Precision.HIGHEST)
        logits = logits.reshape(bb * h, w, -1)
        logits = rel_to_abs(logits)
        logits = logits.reshape(bb, h, w, rr)
        return jnp.broadcast_to(logits[:, :, None, :, :], (bb, h, rr, w, rr))

    rw = relative_logits_1d(q4, rel_width)
    rw = jnp.transpose(rw, (0, 1, 3, 2, 4)).reshape(b, x * y, r * r)
    qt = jnp.transpose(q4, (0, 2, 1, 3))
    rh = relative_logits_1d(qt, rel_height)
    rh = jnp.transpose(rh, (0, 3, 1, 4, 2)).reshape(b, x * y, r * r)
    return rw + rh


# ----------------------------------- main ------------------------------------

if __name__ == "__main__":
    block_size = 4
    rel_size = 8
    dim_head = 16

    batch = 2
    n = block_size * block_size         # typical usage: n = block_size * block_size

    key = jax.random.PRNGKey(0)
    k_q, k_h, k_w = jax.random.split(key, 3)

    scale = dim_head ** (-0.5)
    rel_height = jax.random.normal(k_h, (rel_size * 2 - 1, dim_head),
                                   dtype=jnp.float32) * scale
    rel_width = jax.random.normal(k_w, (rel_size * 2 - 1, dim_head),
                                  dtype=jnp.float32) * scale
    q = jax.random.normal(k_q, (batch, n, dim_head), dtype=jnp.float32)

    ref = _reference_forward(q, rel_height, rel_width, block_size)

    # Performance configuration (per review): DEFAULT dot precision = one bf16 MXU pass.
    fwd = jax.jit(functools.partial(rel_pos_emb_forward, block_size=block_size))
    out = jax.block_until_ready(fwd(q, rel_height, rel_width))
    assert out.shape == (batch, n, rel_size * rel_size), out.shape
    # bf16 operand rounding over the ~32-term fused dot -> expected |err| <~ 2e-2.
    assert jnp.allclose(out, ref, atol=5e-2, rtol=2e-2), \
        float(jnp.max(jnp.abs(out - ref)))

    # Bit-faithful configuration: same kernel, f32-accurate MXU passes.
    fwd_hi = jax.jit(functools.partial(rel_pos_emb_forward, block_size=block_size,
                                       precision=jax.lax.Precision.HIGHEST))
    out_hi = jax.block_until_ready(fwd_hi(q, rel_height, rel_width))
    assert jnp.allclose(out_hi, ref, atol=1e-4, rtol=1e-4), \
        float(jnp.max(jnp.abs(out_hi - ref)))

    print("KERNEL_OK")
</pallas_src>

<mosaic_0001>
module attributes {stable_mosaic.version = 11 : i64} {
  func.func @kernel(%arg0: i32, %arg1: memref<2x256xf32, #tpu.memory_space<vmem>>, %arg2: memref<4x64x256xf32, #tpu.memory_space<vmem>>, %arg3: memref<2x1024xf32, #tpu.memory_space<vmem>>) attributes {dimension_semantics = [#tpu.dimension_semantics<parallel>], iteration_bounds = array<i64: 1>, scalar_prefetch = 0 : i64, scratch_operands = 0 : i64, tpu.core_type = #tpu.core_type<tc>, window_params = [{transform_indices = @transform_0, window_bounds = array<i64: 2, 256>}, {pipeline_mode = #tpu.pipeline_mode<synchronous>, transform_indices = @transform_1, window_bounds = array<i64: 4, 64, 256>}, {transform_indices = @transform_2, window_bounds = array<i64: 2, 1024>}]} {
    %c0 = arith.constant 0 : index
    %c0_0 = arith.constant 0 : index
    %0 = vector.load %arg1[%c0, %c0_0] : memref<2x256xf32, #tpu.memory_space<vmem>>, vector<2x64xf32>
    %c0_1 = arith.constant 0 : index
    %c0_2 = arith.constant 0 : index
    %c0_3 = arith.constant 0 : index
    %1 = vector.load %arg2[%c0_1, %c0_2, %c0_3] : memref<4x64x256xf32, #tpu.memory_space<vmem>>, vector<1x64x256xf32>
    %2 = vector.shape_cast %1 : vector<1x64x256xf32> to vector<64x256xf32>
    %cst = arith.constant dense<0.000000e+00> : vector<2x256xf32>
    %3 = tpu.matmul %0, %2, %cst {dimension_numbers = #tpu.dot_dimension_numbers<[1], [0], [0], [1], [0, 0, 1, 1], [], []>} : vector<2x64xf32>, vector<64x256xf32>, vector<2x256xf32> -> vector<2x256xf32>
    %c0_4 = arith.constant 0 : index
    %c0_5 = arith.constant 0 : index
    %4 = vector.load %arg3[%c0_4, %c0_5] : memref<2x1024xf32, #tpu.memory_space<vmem>>, vector<2x256xf32>
    tpu.vector_store %arg3[%c0_4, %c0_5], %3 {strides = array<i32>} : memref<2x1024xf32, #tpu.memory_space<vmem>>, vector<2x256xf32>,
    %c0_6 = arith.constant 0 : index
    %c64 = arith.constant 64 : index
    %5 = vector.load %arg1[%c0_6, %c64] : memref<2x256xf32, #tpu.memory_space<vmem>>, vector<2x64xf32>
    %c1 = arith.constant 1 : index
    %c0_7 = arith.constant 0 : index
    %c0_8 = arith.constant 0 : index
    %6 = vector.load %arg2[%c1, %c0_7, %c0_8] : memref<4x64x256xf32, #tpu.memory_space<vmem>>, vector<1x64x256xf32>
    %7 = vector.shape_cast %6 : vector<1x64x256xf32> to vector<64x256xf32>
    %cst_9 = arith.constant dense<0.000000e+00> : vector<2x256xf32>
    %8 = tpu.matmul %5, %7, %cst_9 {dimension_numbers = #tpu.dot_dimension_numbers<[1], [0], [0], [1], [0, 0, 1, 1], [], []>} : vector<2x64xf32>, vector<64x256xf32>, vector<2x256xf32> -> vector<2x256xf32>
    %c0_10 = arith.constant 0 : index
    %c256 = arith.constant 256 : index
    %9 = vector.load %arg3[%c0_10, %c256] : memref<2x1024xf32, #tpu.memory_space<vmem>>, vector<2x256xf32>
    tpu.vector_store %arg3[%c0_10, %c256], %8 {strides = array<i32>} : memref<2x1024xf32, #tpu.memory_space<vmem>>, vector<2x256xf32>,
    %c0_11 = arith.constant 0 : index
    %c128 = arith.constant 128 : index
    %10 = vector.load %arg1[%c0_11, %c128] : memref<2x256xf32, #tpu.memory_space<vmem>>, vector<2x64xf32>
    %c2 = arith.constant 2 : index
    %c0_12 = arith.constant 0 : index
    %c0_13 = arith.constant 0 : index
    %11 = vector.load %arg2[%c2, %c0_12, %c0_13] : memref<4x64x256xf32, #tpu.memory_space<vmem>>, vector<1x64x256xf32>
    %12 = vector.shape_cast %11 : vector<1x64x256xf32> to vector<64x256xf32>
    %cst_14 = arith.constant dense<0.000000e+00> : vector<2x256xf32>
    %13 = tpu.matmul %10, %12, %cst_14 {dimension_numbers = #tpu.dot_dimension_numbers<[1], [0], [0], [1], [0, 0, 1, 1], [], []>} : vector<2x64xf32>, vector<64x256xf32>, vector<2x256xf32> -> vector<2x256xf32>
    %c0_15 = arith.constant 0 : index
    %c512 = arith.constant 512 : index
    %14 = vector.load %arg3[%c0_15, %c512] : memref<2x1024xf32, #tpu.memory_space<vmem>>, vector<2x256xf32>
    tpu.vector_store %arg3[%c0_15, %c512], %13 {strides = array<i32>} : memref<2x1024xf32, #tpu.memory_space<vmem>>, vector<2x256xf32>,
    %c0_16 = arith.constant 0 : index
    %c192 = arith.constant 192 : index
    %15 = vector.load %arg1[%c0_16, %c192] : memref<2x256xf32, #tpu.memory_space<vmem>>, vector<2x64xf32>
    %c3 = arith.constant 3 : index
    %c0_17 = arith.constant 0 : index
    %c0_18 = arith.constant 0 : index
    %16 = vector.load %arg2[%c3, %c0_17, %c0_18] : memref<4x64x256xf32, #tpu.memory_space<vmem>>, vector<1x64x256xf32>
    %17 = vector.shape_cast %16 : vector<1x64x256xf32> to vector<64x256xf32>
    %cst_19 = arith.constant dense<0.000000e+00> : vector<2x256xf32>
    %18 = tpu.matmul %15, %17, %cst_19 {dimension_numbers = #tpu.dot_dimension_numbers<[1], [0], [0], [1], [0, 0, 1, 1], [], []>} : vector<2x64xf32>, vector<64x256xf32>, vector<2x256xf32> -> vector<2x256xf32>
    %c0_20 = arith.constant 0 : index
    %c768 = arith.constant 768 : index
    %19 = vector.load %arg3[%c0_20, %c768] : memref<2x1024xf32, #tpu.memory_space<vmem>>, vector<2x256xf32>
    tpu.vector_store %arg3[%c0_20, %c768], %18 {strides = array<i32>} : memref<2x1024xf32, #tpu.memory_space<vmem>>, vector<2x256xf32>,
    return
  }
  func.func @transform_0(%arg0: i32) -> (i32, i32) {
    %c0_i32 = arith.constant 0 : i32
    %c0_i32_0 = arith.constant 0 : i32
    return %arg0, %c0_i32 : i32, i32
  }
  func.func @transform_1(%arg0: i32) -> (i32, i32, i32) {
    %c0_i32 = arith.constant 0 : i32
    %c0_i32_0 = arith.constant 0 : i32
    %c0_i32_1 = arith.constant 0 : i32
    %c0_i32_2 = arith.constant 0 : i32
    return %c0_i32, %c0_i32_0, %c0_i32_1 : i32, i32, i32
  }
  func.func @transform_2(%arg0: i32) -> (i32, i32) {
    %c0_i32 = arith.constant 0 : i32
    %c0_i32_0 = arith.constant 0 : i32
    return %arg0, %c0_i32 : i32, i32
  }
}

</mosaic_0001>

<llo_original>
// kernel: rel_pos_emb_forward.1
$region0: #{rel_pos_emb_forward.1}
  #allocation0 [shape = 'u32[]', space=smem, size = 0x4, offset = 0x4, fixed_abs, tag = 'smem constant byte address 0x4 - core index']
  #allocation1 [shape = 'u32[144,128]{1,0:T(1,128)}', space=vmem, size = 0x12000, scoped, tag = 'internal scratch']
  %s0 = inlined_call_operand.vmem [shape: f32[2,256], index: 0, kind: input, shape index: {}]
  %s1 = inlined_call_operand.vmem [shape: f32[4,64,256], index: 1, kind: input, shape index: {}]
  %s2 = inlined_call_operand.vmem [shape: f32[2,1024], index: 2, kind: output, shape index: {}]
  %s3 = sld [smem:[#allocation0]]
  $region18: #{rel_pos_emb_forward.1} parent=0
    _
  %s5 = ssub.s32 1, %s3
  %s6 = scalar_select 0, %s5, %s3
  // Predicated region
  $region2: #{rel_pos_emb_forward.1} parent=0 // pred_check
    _
  $region3: #{rel_pos_emb_forward.1} parent=0 // pred_check_branch
    %8 = sbr.rel (0) target = $region5
  $region4: #{rel_pos_emb_forward.1} parent=0 // pred_region
    _
  $region5: #{rel_pos_emb_forward.1} parent=0 // pred_fallthru
    _
  // Predicated region
  $region6: #{rel_pos_emb_forward.1} parent=0 // pred_check
    _
  $region7: #{rel_pos_emb_forward.1} parent=0 // pred_check_branch
    %10 = sbr.rel (0) target = $region9
  $region8: #{rel_pos_emb_forward.1} parent=0 // pred_region
    _
  $region9: #{rel_pos_emb_forward.1} parent=0 // pred_fallthru
    _
  %v11 = vld [vmem:[%s0] sm:$0x3]
  %v12 = vld [vmem:[%s1] sm:$0xff]
  %v13 = vld [vmem:[%s1 + $0x8] sm:$0xff]
  %v14 = vld [vmem:[%s1 + $0x10] sm:$0xff]
  %v15 = vld [vmem:[%s1 + $0x18] sm:$0xff]
  %v16 = vld [vmem:[%s1 + $0x20] sm:$0xff]
  %v17 = vld [vmem:[%s1 + $0x28] sm:$0xff]
  %v18 = vld [vmem:[%s1 + $0x30] sm:$0xff]
  %v19 = vld [vmem:[%s1 + $0x38] sm:$0xff]
  %v20 = vld [vmem:[%s1 + $0x40] sm:$0xff]
  %v21 = vld [vmem:[%s1 + $0x48] sm:$0xff]
  %v22 = vld [vmem:[%s1 + $0x50] sm:$0xff]
  %v23 = vld [vmem:[%s1 + $0x58] sm:$0xff]
  %v24 = vld [vmem:[%s1 + $0x60] sm:$0xff]
  %v25 = vld [vmem:[%s1 + $0x68] sm:$0xff]
  %v26 = vld [vmem:[%s1 + $0x70] sm:$0xff]
  %v27 = vld [vmem:[%s1 + $0x78] sm:$0xff]
  %vm28 = vcmask 523264
  %v30 = vsel %vm28, %v11, 0
  %32 = vmatprep.subr.mxu0 %v13
  %33 = vmatpush1.msra.mxu0 %v12
  %34 = vmatprep.subr.mxu0 %v15
  %35 = vmatpush1.msra.mxu0 %v14
  %36 = vmatprep.subr.mxu0 %v17
  %37 = vmatpush1.msra.mxu0 %v16
  %38 = vmatprep.subr.mxu0 %v19
  %39 = vmatpush1.msra.mxu0 %v18
  %40 = vmatprep.subr.mxu0 %v21
  %41 = vmatpush1.msra.mxu0 %v20
  %42 = vmatprep.subr.mxu0 %v23
  %43 = vmatpush1.msra.mxu0 %v22
  %44 = vmatprep.subr.mxu0 %v25
  %45 = vmatpush1.msra.mxu0 %v24
  %46 = vmatprep.subr.mxu0 %v27
  %47 = vmatpush1.msra.mxu0 %v26
  %48 = vmatprep.subr.mxu0 0.0
  %49 = vmatpush1.msra.mxu0 0.0
  %50 = vmatprep.subr.mxu0 0.0
  %51 = vmatpush1.msra.mxu0 0.0
  %52 = vmatprep.subr.mxu0 0.0
  %53 = vmatpush1.msra.mxu0 0.0
  %54 = vmatprep.subr.mxu0 0.0
  %55 = vmatpush1.msra.mxu0 0.0
  %56 = vmatprep.subr.mxu0 0.0
  %57 = vmatpush1.msra.mxu0 0.0
  %58 = vmatprep.subr.mxu0 0.0
  %59 = vmatpush1.msra.mxu0 0.0
  %60 = vmatprep.subr.mxu0 0.0
  %61 = vmatpush1.msra.mxu0 0.0
  %62 = vmatprep.subr.mxu0 0.0
  %63 = vmatpush1.msra.mxu0 0.0
  %64 = vmatprep.subr.mxu0 0.0
  %65 = vmatpush1.msra.mxu0 0.0
  %66 = vmatprep.subr.mxu0 0.0
  %67 = vmatpush1.msra.mxu0 0.0
  %68 = vmatprep.subr.mxu0 0.0
  %69 = vmatpush1.msra.mxu0 0.0
  %70 = vmatprep.subr.mxu0 0.0
  %71 = vmatpush1.msra.mxu0 0.0
  %72 = vmatprep.subr.mxu0 0.0
  %73 = vmatpush1.msra.mxu0 0.0
  %74 = vmatprep.subr.mxu0 0.0
  %75 = vmatpush1.msra.mxu0 0.0
  %76 = vmatprep.subr.mxu0 0.0
  %77 = vmatpush1.msra.mxu0 0.0
  %78 = vmatprep.subr.mxu0 0.0
  %79 = vmatpush1.msra.mxu0 0.0
  %80 = vmatprep.subr.mxu0 0.0
  %81 = vmatpush1.msra.mxu0 0.0
  %82 = vmatprep.subr.mxu0 0.0
  %83 = vmatpush1.msra.mxu0 0.0
  %84 = vmatprep.subr.mxu0 0.0
  %85 = vmatpush1.msra.mxu0 0.0
  %86 = vmatprep.subr.mxu0 0.0
  %87 = vmatpush1.msra.mxu0 0.0
  %88 = vmatprep.subr.mxu0 0.0
  %89 = vmatpush1.msra.mxu0 0.0
  %90 = vmatprep.subr.mxu0 0.0
  %91 = vmatpush1.msra.mxu0 0.0
  %92 = vmatprep.subr.mxu0 0.0
  %93 = vmatpush1.msra.mxu0 0.0
  %94 = vmatprep.subr.mxu0 0.0
  %95 = vmatpush1.msra.mxu0 0.0
  %96 = vmatprep.mubr.f32.mxu0 0.0
  %97 = vmatmul.mubr.f32.gmra.mrb[0].mxu0 %v30
  %v98 = vpop.f32.mrb[0].mxu0
  %v99 = vadd.f32 0.0, %v98
  %v100 = vpop.f32.mrb[0].mxu0
  %v101 = vadd.f32 0.0, %v100
  %102 = vdwg.mxu0
  %v105 = vcombine.low %v99, %v101
  %v107 = vunpack.c.l.s4 1983009808
  %v108 = vunpack.c.0.s8 %v107
  %v109 = vlaneseq
  %v110 = vshrl.u32 %v109, 7
  %v111 = vsub.s32 %v108, %v110
  %v112 = vrot.slane %v105, %v111
  %114 = vst [vmem:[%s2] sm:$0xf] %v112
  %v115 = vld [vmem:[%s0] sm:$0x3]
  %s116 = scalar_lea.vmem %s1, 128
  %v117 = vld [vmem:[%s116] sm:$0xff]
  %v118 = vld [vmem:[%s116 + $0x8] sm:$0xff]
  %v119 = vld [vmem:[%s116 + $0x10] sm:$0xff]
  %v120 = vld [vmem:[%s116 + $0x18] sm:$0xff]
  %v121 = vld [vmem:[%s116 + $0x20] sm:$0xff]
  %v122 = vld [vmem:[%s116 + $0x28] sm:$0xff]
  %v123 = vld [vmem:[%s116 + $0x30] sm:$0xff]
  %v124 = vld [vmem:[%s116 + $0x38] sm:$0xff]
  %v125 = vld [vmem:[%s116 + $0x40] sm:$0xff]
  %v126 = vld [vmem:[%s116 + $0x48] sm:$0xff]
  %v127 = vld [vmem:[%s116 + $0x50] sm:$0xff]
  %v128 = vld [vmem:[%s116 + $0x58] sm:$0xff]
  %v129 = vld [vmem:[%s116 + $0x60] sm:$0xff]
  %v130 = vld [vmem:[%s116 + $0x68] sm:$0xff]
  %v131 = vld [vmem:[%s116 + $0x70] sm:$0xff]
  %v132 = vld [vmem:[%s116 + $0x78] sm:$0xff]
  %v135 = vunpack.c.l.s4 1983009808
  %v136 = vunpack.c.0.s8 %v135
  %v137 = vlaneseq
  %v138 = vshrl.u32 %v137, 7
  %v139 = vsub.s32 %v136, %v138
  %v140 = vrot.slane %v115, %v139
  %141 = vrot.lane.b32.xlu0 %v140, 64
  %v142 = vpop.permute.xlu0 %141
  %v143 = vsel %vm28, %v142, 0
  %145 = vmatprep.subr.mxu0 %v118
  %146 = vmatpush1.msra.mxu0 %v117
  %147 = vmatprep.subr.mxu0 %v120
  %148 = vmatpush1.msra.mxu0 %v119
  %149 = vmatprep.subr.mxu0 %v122
  %150 = vmatpush1.msra.mxu0 %v121
  %151 = vmatprep.subr.mxu0 %v124
  %152 = vmatpush1.msra.mxu0 %v123
  %153 = vmatprep.subr.mxu0 %v126
  %154 = vmatpush1.msra.mxu0 %v125
  %155 = vmatprep.subr.mxu0 %v128
  %156 = vmatpush1.msra.mxu0 %v127
  %157 = vmatprep.subr.mxu0 %v130
  %158 = vmatpush1.msra.mxu0 %v129
  %159 = vmatprep.subr.mxu0 %v132
  %160 = vmatpush1.msra.mxu0 %v131
  %161 = vmatprep.subr.mxu0 0.0
  %162 = vmatpush1.msra.mxu0 0.0
  %163 = vmatprep.subr.mxu0 0.0
  %164 = vmatpush1.msra.mxu0 0.0
  %165 = vmatprep.subr.mxu0 0.0
  %166 = vmatpush1.msra.mxu0 0.0
  %167 = vmatprep.subr.mxu0 0.0
  %168 = vmatpush1.msra.mxu0 0.0
  %169 = vmatprep.subr.mxu0 0.0
  %170 = vmatpush1.msra.mxu0 0.0
  %171 = vmatprep.subr.mxu0 0.0
  %172 = vmatpush1.msra.mxu0 0.0
  %173 = vmatprep.subr.mxu0 0.0
  %174 = vmatpush1.msra.mxu0 0.0
  %175 = vmatprep.subr.mxu0 0.0
  %176 = vmatpush1.msra.mxu0 0.0
  %177 = vmatprep.subr.mxu0 0.0
  %178 = vmatpush1.msra.mxu0 0.0
  %179 = vmatprep.subr.mxu0 0.0
  %180 = vmatpush1.msra.mxu0 0.0
  %181 = vmatprep.subr.mxu0 0.0
  %182 = vmatpush1.msra.mxu0 0.0
  %183 = vmatprep.subr.mxu0 0.0
  %184 = vmatpush1.msra.mxu0 0.0
  %185 = vmatprep.subr.mxu0 0.0
  %186 = vmatpush1.msra.mxu0 0.0
  %187 = vmatprep.subr.mxu0 0.0
  %188 = vmatpush1.msra.mxu0 0.0
  %189 = vmatprep.subr.mxu0 0.0
  %190 = vmatpush1.msra.mxu0 0.0
  %191 = vmatprep.subr.mxu0 0.0
  %192 = vmatpush1.msra.mxu0 0.0
  %193 = vmatprep.subr.mxu0 0.0
  %194 = vmatpush1.msra.mxu0 0.0
  %195 = vmatprep.subr.mxu0 0.0
  %196 = vmatpush1.msra.mxu0 0.0
  %197 = vmatprep.subr.mxu0 0.0
  %198 = vmatpush1.msra.mxu0 0.0
  %199 = vmatprep.subr.mxu0 0.0
  %200 = vmatpush1.msra.mxu0 0.0
  %201 = vmatprep.subr.mxu0 0.0
  %202 = vmatpush1.msra.mxu0 0.0
  %203 = vmatprep.subr.mxu0 0.0
  %204 = vmatpush1.msra.mxu0 0.0
  %205 = vmatprep.subr.mxu0 0.0
  %206 = vmatpush1.msra.mxu0 0.0
  %207 = vmatprep.subr.mxu0 0.0
  %208 = vmatpush1.msra.mxu0 0.0
  %209 = vmatprep.mubr.f32.mxu0 0.0
  %210 = vmatmul.mubr.f32.gmra.mrb[0].mxu0 %v143
  %v211 = vpop.f32.mrb[0].mxu0
  %v212 = vadd.f32 0.0, %v211
  %v213 = vpop.f32.mrb[0].mxu0
  %v214 = vadd.f32 0.0, %v213
  %215 = vdwg.mxu0
  %v218 = vcombine.low %v212, %v214
  %v220 = vunpack.c.l.s4 1983009808
  %v221 = vunpack.c.0.s8 %v220
  %v222 = vlaneseq
  %v223 = vshrl.u32 %v222, 7
  %v224 = vsub.s32 %v221, %v223
  %v225 = vrot.slane %v218, %v224
  %227 = vst [vmem:[%s2 + $0x4] sm:$0xf] %v225
  %v228 = vld [vmem:[%s0 + $0x2] sm:$0x3]
  %s229 = scalar_lea.vmem %s1, 256
  %v230 = vld [vmem:[%s229] sm:$0xff]
  %v231 = vld [vmem:[%s229 + $0x8] sm:$0xff]
  %v232 = vld [vmem:[%s229 + $0x10] sm:$0xff]
  %v233 = vld [vmem:[%s229 + $0x18] sm:$0xff]
  %v234 = vld [vmem:[%s229 + $0x20] sm:$0xff]
  %v235 = vld [vmem:[%s229 + $0x28] sm:$0xff]
  %v236 = vld [vmem:[%s229 + $0x30] sm:$0xff]
  %v237 = vld [vmem:[%s229 + $0x38] sm:$0xff]
  %v238 = vld [vmem:[%s229 + $0x40] sm:$0xff]
  %v239 = vld [vmem:[%s229 + $0x48] sm:$0xff]
  %v240 = vld [vmem:[%s229 + $0x50] sm:$0xff]
  %v241 = vld [vmem:[%s229 + $0x58] sm:$0xff]
  %v242 = vld [vmem:[%s229 + $0x60] sm:$0xff]
  %v243 = vld [vmem:[%s229 + $0x68] sm:$0xff]
  %v244 = vld [vmem:[%s229 + $0x70] sm:$0xff]
  %v245 = vld [vmem:[%s229 + $0x78] sm:$0xff]
  %v247 = vsel %vm28, %v228, 0
  %249 = vmatprep.subr.mxu0 %v231
  %250 = vmatpush1.msra.mxu0 %v230
  %251 = vmatprep.subr.mxu0 %v233
  %252 = vmatpush1.msra.mxu0 %v232
  %253 = vmatprep.subr.mxu0 %v235
  %254 = vmatpush1.msra.mxu0 %v234
  %255 = vmatprep.subr.mxu0 %v237
  %256 = vmatpush1.msra.mxu0 %v236
  %257 = vmatprep.subr.mxu0 %v239
  %258 = vmatpush1.msra.mxu0 %v238
  %259 = vmatprep.subr.mxu0 %v241
  %260 = vmatpush1.msra.mxu0 %v240
  %261 = vmatprep.subr.mxu0 %v243
  %262 = vmatpush1.msra.mxu0 %v242
  %263 = vmatprep.subr.mxu0 %v245
  %264 = vmatpush1.msra.mxu0 %v244
  %265 = vmatprep.subr.mxu0 0.0
  %266 = vmatpush1.msra.mxu0 0.0
  %267 = vmatprep.subr.mxu0 0.0
  %268 = vmatpush1.msra.mxu0 0.0
  %269 = vmatprep.subr.mxu0 0.0
  %270 = vmatpush1.msra.mxu0 0.0
  %271 = vmatprep.subr.mxu0 0.0
  %272 = vmatpush1.msra.mxu0 0.0
  %273 = vmatprep.subr.mxu0 0.0
  %274 = vmatpush1.msra.mxu0 0.0
  %275 = vmatprep.subr.mxu0 0.0
  %276 = vmatpush1.msra.mxu0 0.0
  %277 = vmatprep.subr.mxu0 0.0
  %278 = vmatpush1.msra.mxu0 0.0
  %279 = vmatprep.subr.mxu0 0.0
  %280 = vmatpush1.msra.mxu0 0.0
  %281 = vmatprep.subr.mxu0 0.0
  %282 = vmatpush1.msra.mxu0 0.0
  %283 = vmatprep.subr.mxu0 0.0
  %284 = vmatpush1.msra.mxu0 0.0
  %285 = vmatprep.subr.mxu0 0.0
  %286 = vmatpush1.msra.mxu0 0.0
  %287 = vmatprep.subr.mxu0 0.0
  %288 = vmatpush1.msra.mxu0 0.0
  %289 = vmatprep.subr.mxu0 0.0
  %290 = vmatpush1.msra.mxu0 0.0
  %291 = vmatprep.subr.mxu0 0.0
  %292 = vmatpush1.msra.mxu0 0.0
  %293 = vmatprep.subr.mxu0 0.0
  %294 = vmatpush1.msra.mxu0 0.0
  %295 = vmatprep.subr.mxu0 0.0
  %296 = vmatpush1.msra.mxu0 0.0
  %297 = vmatprep.subr.mxu0 0.0
  %298 = vmatpush1.msra.mxu0 0.0
  %299 = vmatprep.subr.mxu0 0.0
  %300 = vmatpush1.msra.mxu0 0.0
  %301 = vmatprep.subr.mxu0 0.0
  %302 = vmatpush1.msra.mxu0 0.0
  %303 = vmatprep.subr.mxu0 0.0
  %304 = vmatpush1.msra.mxu0 0.0
  %305 = vmatprep.subr.mxu0 0.0
  %306 = vmatpush1.msra.mxu0 0.0
  %307 = vmatprep.subr.mxu0 0.0
  %308 = vmatpush1.msra.mxu0 0.0
  %309 = vmatprep.subr.mxu0 0.0
  %310 = vmatpush1.msra.mxu0 0.0
  %311 = vmatprep.subr.mxu0 0.0
  %312 = vmatpush1.msra.mxu0 0.0
  %313 = vmatprep.mubr.f32.mxu0 0.0
  %314 = vmatmul.mubr.f32.gmra.mrb[0].mxu0 %v247
  %v315 = vpop.f32.mrb[0].mxu0
  %v316 = vadd.f32 0.0, %v315
  %v317 = vpop.f32.mrb[0].mxu0
  %v318 = vadd.f32 0.0, %v317
  %319 = vdwg.mxu0
  %v322 = vcombine.low %v316, %v318
  %v324 = vunpack.c.l.s4 1983009808
  %v325 = vunpack.c.0.s8 %v324
  %v326 = vlaneseq
  %v327 = vshrl.u32 %v326, 7
  %v328 = vsub.s32 %v325, %v327
  %v329 = vrot.slane %v322, %v328
  %331 = vst [vmem:[%s2 + $0x8] sm:$0xf] %v329
  %v332 = vld [vmem:[%s0 + $0x2] sm:$0x3]
  %s333 = scalar_lea.vmem %s1, 384
  %v334 = vld [vmem:[%s333] sm:$0xff]
  %v335 = vld [vmem:[%s333 + $0x8] sm:$0xff]
  %v336 = vld [vmem:[%s333 + $0x10] sm:$0xff]
  %v337 = vld [vmem:[%s333 + $0x18] sm:$0xff]
  %v338 = vld [vmem:[%s333 + $0x20] sm:$0xff]
  %v339 = vld [vmem:[%s333 + $0x28] sm:$0xff]
  %v340 = vld [vmem:[%s333 + $0x30] sm:$0xff]
  %v341 = vld [vmem:[%s333 + $0x38] sm:$0xff]
  %v342 = vld [vmem:[%s333 + $0x40] sm:$0xff]
  %v343 = vld [vmem:[%s333 + $0x48] sm:$0xff]
  %v344 = vld [vmem:[%s333 + $0x50] sm:$0xff]
  %v345 = vld [vmem:[%s333 + $0x58] sm:$0xff]
  %v346 = vld [vmem:[%s333 + $0x60] sm:$0xff]
  %v347 = vld [vmem:[%s333 + $0x68] sm:$0xff]
  %v348 = vld [vmem:[%s333 + $0x70] sm:$0xff]
  %v349 = vld [vmem:[%s333 + $0x78] sm:$0xff]
  %v352 = vunpack.c.l.s4 1983009808
  %v353 = vunpack.c.0.s8 %v352
  %v354 = vlaneseq
  %v355 = vshrl.u32 %v354, 7
  %v356 = vsub.s32 %v353, %v355
  %v357 = vrot.slane %v332, %v356
  %358 = vrot.lane.b32.xlu0 %v357, 64
  %v359 = vpop.permute.xlu0 %358
  %v360 = vsel %vm28, %v359, 0
  %362 = vmatprep.subr.mxu0 %v335
  %363 = vmatpush1.msra.mxu0 %v334
  %364 = vmatprep.subr.mxu0 %v337
  %365 = vmatpush1.msra.mxu0 %v336
  %366 = vmatprep.subr.mxu0 %v339
  %367 = vmatpush1.msra.mxu0 %v338
  %368 = vmatprep.subr.mxu0 %v341
  %369 = vmatpush1.msra.mxu0 %v340
  %370 = vmatprep.subr.mxu0 %v343
  %371 = vmatpush1.msra.mxu0 %v342
  %372 = vmatprep.subr.mxu0 %v345
  %373 = vmatpush1.msra.mxu0 %v344
  %374 = vmatprep.subr.mxu0 %v347
  %375 = vmatpush1.msra.mxu0 %v346
  %376 = vmatprep.subr.mxu0 %v349
  %377 = vmatpush1.msra.mxu0 %v348
  %378 = vmatprep.subr.mxu0 0.0
  %379 = vmatpush1.msra.mxu0 0.0
  %380 = vmatprep.subr.mxu0 0.0
  %381 = vmatpush1.msra.mxu0 0.0
  %382 = vmatprep.subr.mxu0 0.0
  %383 = vmatpush1.msra.mxu0 0.0
  %384 = vmatprep.subr.mxu0 0.0
  %385 = vmatpush1.msra.mxu0 0.0
  %386 = vmatprep.subr.mxu0 0.0
  %387 = vmatpush1.msra.mxu0 0.0
  %388 = vmatprep.subr.mxu0 0.0
  %389 = vmatpush1.msra.mxu0 0.0
  %390 = vmatprep.subr.mxu0 0.0
  %391 = vmatpush1.msra.mxu0 0.0
  %392 = vmatprep.subr.mxu0 0.0
  %393 = vmatpush1.msra.mxu0 0.0
  %394 = vmatprep.subr.mxu0 0.0
  %395 = vmatpush1.msra.mxu0 0.0
  %396 = vmatprep.subr.mxu0 0.0
  %397 = vmatpush1.msra.mxu0 0.0
  %398 = vmatprep.subr.mxu0 0.0
  %399 = vmatpush1.msra.mxu0 0.0
  %400 = vmatprep.subr.mxu0 0.0
  %401 = vmatpush1.msra.mxu0 0.0
  %402 = vmatprep.subr.mxu0 0.0
  %403 = vmatpush1.msra.mxu0 0.0
  %404 = vmatprep.subr.mxu0 0.0
  %405 = vmatpush1.msra.mxu0 0.0
  %406 = vmatprep.subr.mxu0 0.0
  %407 = vmatpush1.msra.mxu0 0.0
  %408 = vmatprep.subr.mxu0 0.0
  %409 = vmatpush1.msra.mxu0 0.0
  %410 = vmatprep.subr.mxu0 0.0
  %411 = vmatpush1.msra.mxu0 0.0
  %412 = vmatprep.subr.mxu0 0.0
  %413 = vmatpush1.msra.mxu0 0.0
  %414 = vmatprep.subr.mxu0 0.0
  %415 = vmatpush1.msra.mxu0 0.0
  %416 = vmatprep.subr.mxu0 0.0
  %417 = vmatpush1.msra.mxu0 0.0
  %418 = vmatprep.subr.mxu0 0.0
  %419 = vmatpush1.msra.mxu0 0.0
  %420 = vmatprep.subr.mxu0 0.0
  %421 = vmatpush1.msra.mxu0 0.0
  %422 = vmatprep.subr.mxu0 0.0
  %423 = vmatpush1.msra.mxu0 0.0
  %424 = vmatprep.subr.mxu0 0.0
  %425 = vmatpush1.msra.mxu0 0.0
  %426 = vmatprep.mubr.f32.mxu0 0.0
  %427 = vmatmul.mubr.f32.gmra.mrb[0].mxu0 %v360
  %v428 = vpop.f32.mrb[0].mxu0
  %v429 = vadd.f32 0.0, %v428
  %v430 = vpop.f32.mrb[0].mxu0
  %v431 = vadd.f32 0.0, %v430
  %432 = vdwg.mxu0
  %v435 = vcombine.low %v429, %v431
  %v437 = vunpack.c.l.s4 1983009808
  %v438 = vunpack.c.0.s8 %v437
  %v439 = vlaneseq
  %v440 = vshrl.u32 %v439, 7
  %v441 = vsub.s32 %v438, %v440
  %v442 = vrot.slane %v435, %v441
  %444 = vst [vmem:[%s2 + $0xc] sm:$0xf] %v442
  // Predicated region
  $region10: #{rel_pos_emb_forward.1} parent=0 // pred_check
    _
  $region11: #{rel_pos_emb_forward.1} parent=0 // pred_check_branch
    %446 = sbr.rel (0) target = $region13
  $region12: #{rel_pos_emb_forward.1} parent=0 // pred_region
    _
  $region13: #{rel_pos_emb_forward.1} parent=0 // pred_fallthru
    _
  // Predicated region
  $region14: #{rel_pos_emb_forward.1} parent=0 // pred_check
    _
  $region15: #{rel_pos_emb_forward.1} parent=0 // pred_check_branch
    %448 = sbr.rel (0) target = $region17
  $region16: #{rel_pos_emb_forward.1} parent=0 // pred_region
    _
  $region17: #{rel_pos_emb_forward.1} parent=0 // pred_fallthru
    _

</llo_original>
